<compile_context>
chip_gen: v7x
topology: tpu7x:2x2x1
jax: 0.10.0
libtpu: 0.0.40
codegen_flags: <defaults>
</compile_context>

<pallas_src>
import jax
import jax.numpy as jnp
from jax.experimental import pallas as pl
from jax.experimental.pallas import tpu as pltpu


def _wheels_joints_in_kernel(x_ref, w_ref, b_ref, alpha_ref, o_ref):
    # x_ref: (tm, Fp) VMEM packed rows; w_ref: (Fp, Hp) block-diagonal weight (resident);
    # b_ref: (1, Hp) bias (resident); alpha_ref: (1, 1) SMEM PReLU slope; o_ref: (tm, Hp).
    y = jnp.dot(x_ref[...], w_ref[...], preferred_element_type=jnp.float32)
    y = y + b_ref[...]                       # broadcast (1, Hp) over rows
    a = alpha_ref[0, 0]
    # PReLU: y if y > 0 else a * y
    o_ref[...] = jnp.where(y > 0.0, y, a * y).astype(o_ref.dtype)


def _pack_factor(F):
    # How many logical rows fit in one 128-lane packed row.
    if F <= 128 and 128 % F == 0:
        return 128 // F
    return 1


def _choose_row_tile(mp):
    """Pick the packed-row tile size. `mp` is a multiple of 8; result is too."""
    max_tile = 1024  # 1024x128 f32 in + 1024x256 f32 out, ~3 MiB double-buffered: fits everywhere
    if mp <= 8:
        return mp
    if mp <= max_tile:
        # Split into ~2 grid steps so v7x's two TensorCores both get work.
        half = (mp // 2 + 7) // 8 * 8
        return max(8, half)
    return max_tile


@jax.jit
def wheels_joints_in(x, w, b, alpha):
    """Linear + PReLU.  x: (E, S, F) -> (E, S, H).  w: (F, H), b: (H,), alpha: scalar."""
    E, S, F = x.shape
    H = w.shape[1]
    M = E * S

    pack = _pack_factor(F)          # 8 for F=16
    Fp, Hp = pack * F, pack * H     # packed widths: 128, 256 for (F, H) = (16, 32)

    # Pad rows so the packed row count is a multiple of 8 (sublane alignment).
    row_align = pack * 8
    M_pad = ((M + row_align - 1) // row_align) * row_align
    x2 = x.reshape(M, F)
    if M_pad != M:
        x2 = jnp.pad(x2, ((0, M_pad - M), (0, 0)))
    Mp = M_pad // pack
    xp = x2.reshape(Mp, Fp)         # lane-dense packing: pure row-major reshape

    # Block-diagonal weight (W on the diagonal, `pack` times) and tiled bias,
    # built once at trace time. Off-diagonal exact zeros keep the result bit-identical.
    wp = jnp.kron(jnp.eye(pack, dtype=w.dtype), w)   # (Fp, Hp)
    bp = jnp.tile(b, pack).reshape(1, Hp)            # (1, Hp)
    alpha2 = jnp.asarray(alpha, jnp.float32).reshape(1, 1)

    tm = _choose_row_tile(Mp)
    grid = (pl.cdiv(Mp, tm),)

    cost = pl.CostEstimate(
        flops=2 * Mp * Fp * Hp,
        bytes_accessed=4 * (Mp * Fp + Fp * Hp + Hp + Mp * Hp),
        transcendentals=0,
    )

    out_p = pl.pallas_call(
        _wheels_joints_in_kernel,
        out_shape=jax.ShapeDtypeStruct((Mp, Hp), x.dtype),
        grid=grid,
        in_specs=[
            pl.BlockSpec((tm, Fp), lambda i: (i, 0)),            # packed activations (tiled)
            pl.BlockSpec((Fp, Hp), lambda i: (0, 0)),            # block-diag weight (resident)
            pl.BlockSpec((1, Hp), lambda i: (0, 0)),             # bias (resident)
            pl.BlockSpec(memory_space=pltpu.MemorySpace.SMEM),   # PReLU alpha scalar
        ],
        out_specs=pl.BlockSpec((tm, Hp), lambda i: (i, 0)),
        compiler_params=pltpu.CompilerParams(
            dimension_semantics=("parallel",),
            vmem_limit_bytes=32 * 1024 * 1024,   # safe on v5e/v6e/v7x; tiles stay well under it
        ),
        cost_estimate=cost,
    )(xp, wp, bp, alpha2)

    # Unpack: (Mp, Hp) -> (M_pad, H) -> drop padded rows -> (E, S, H)
    out = out_p.reshape(M_pad, H)[:M]
    return out.reshape(E, S, H)


if __name__ == "__main__":
    # Small shapes implied by the module: (episodes, steps, wheels_joints_shape)
    episodes, steps = 2, 8
    wheels_joints_shape = 16          # args.wheels_joints_shape
    encode_size = 32                  # args.wheels_joints_encode_size

    key = jax.random.PRNGKey(0)
    kx, kw, kb = jax.random.split(key, 3)

    x = jax.random.normal(kx, (episodes, steps, wheels_joints_shape), jnp.float32)

    # Deterministic parameter init (nn.Linear-style uniform(-1/sqrt(F), 1/sqrt(F))).
    bound = 1.0 / (wheels_joints_shape ** 0.5)
    w = jax.random.uniform(kw, (wheels_joints_shape, encode_size), jnp.float32,
                           minval=-bound, maxval=bound)
    b = jax.random.uniform(kb, (encode_size,), jnp.float32,
                           minval=-bound, maxval=bound)
    alpha = jnp.float32(0.25)         # PReLU default init

    out = wheels_joints_in(x, w, b, alpha)
    out = jax.block_until_ready(out)

    # Silent correctness check against plain-JAX reference.
    ref = x.reshape(-1, wheels_joints_shape) @ w + b
    ref = jnp.where(ref > 0, ref, alpha * ref).reshape(episodes, steps, encode_size)
    assert out.shape == (episodes, steps, encode_size)
    assert jnp.allclose(out, ref, atol=1e-5, rtol=1e-5)

    print("KERNEL_OK")
</pallas_src>

<mosaic_0001>
module attributes {stable_mosaic.version = 11 : i64} {
  func.func @_wheels_joints_in_kernel(%arg0: i32, %arg1: memref<8x128xf32, #tpu.memory_space<vmem>>, %arg2: memref<128x256xf32, #tpu.memory_space<vmem>>, %arg3: memref<1x256xf32, #tpu.memory_space<vmem>>, %arg4: memref<1x1xf32, #tpu.memory_space<smem>>, %arg5: memref<8x256xf32, #tpu.memory_space<vmem>>) attributes {dimension_semantics = [#tpu.dimension_semantics<parallel>], iteration_bounds = array<i64: 1>, scalar_prefetch = 0 : i64, scratch_operands = 0 : i64, tpu.core_type = #tpu.core_type<tc>, window_params = [{transform_indices = @transform_0, window_bounds = array<i64: 8, 128>}, {pipeline_mode = #tpu.pipeline_mode<synchronous>, transform_indices = @transform_1, window_bounds = array<i64: 128, 256>}, {pipeline_mode = #tpu.pipeline_mode<synchronous>, transform_indices = @transform_2, window_bounds = array<i64: 1, 256>}, {transform_indices = @transform_3, window_bounds = array<i64: 1, 1>}, {transform_indices = @transform_4, window_bounds = array<i64: 8, 256>}]} {
    %c0 = arith.constant 0 : index
    %c0_0 = arith.constant 0 : index
    %0 = vector.load %arg1[%c0, %c0_0] : memref<8x128xf32, #tpu.memory_space<vmem>>, vector<8x128xf32>
    %c0_1 = arith.constant 0 : index
    %c0_2 = arith.constant 0 : index
    %1 = vector.load %arg2[%c0_1, %c0_2] : memref<128x256xf32, #tpu.memory_space<vmem>>, vector<128x256xf32>
    %cst = arith.constant dense<0.000000e+00> : vector<8x256xf32>
    %2 = tpu.matmul %0, %1, %cst {dimension_numbers = #tpu.dot_dimension_numbers<[1], [0], [0], [1], [0, 0, 1, 1], [], []>} : vector<8x128xf32>, vector<128x256xf32>, vector<8x256xf32> -> vector<8x256xf32>
    %c0_3 = arith.constant 0 : index
    %c0_4 = arith.constant 0 : index
    %3 = vector.load %arg3[%c0_3, %c0_4] : memref<1x256xf32, #tpu.memory_space<vmem>>, vector<1x256xf32>
    %4 = vector.broadcast %3 : vector<1x256xf32> to vector<8x256xf32>
    %5 = arith.addf %2, %4 : vector<8x256xf32>
    %c0_5 = arith.constant 0 : index
    %c0_6 = arith.constant 0 : index
    %6 = memref.load %arg4[%c0_5, %c0_6] : memref<1x1xf32, #tpu.memory_space<smem>>
    %cst_7 = arith.constant 0.000000e+00 : f32
    %7 = vector.broadcast %cst_7 : f32 to vector<8x256xf32>
    %8 = arith.cmpf ogt, %5, %7 : vector<8x256xf32>
    %9 = vector.broadcast %6 : f32 to vector<8x256xf32>
    %10 = arith.mulf %9, %5 : vector<8x256xf32>
    %11 = arith.select %8, %5, %10 : vector<8x256xi1>, vector<8x256xf32>
    %c0_8 = arith.constant 0 : index
    %c0_9 = arith.constant 0 : index
    %12 = vector.load %arg5[%c0_8, %c0_9] : memref<8x256xf32, #tpu.memory_space<vmem>>, vector<8x256xf32>
    tpu.vector_store %arg5[%c0_8, %c0_9], %11 {strides = array<i32>} : memref<8x256xf32, #tpu.memory_space<vmem>>, vector<8x256xf32>,
    return
  }
  func.func @transform_0(%arg0: i32) -> (i32, i32) {
    %c0_i32 = arith.constant 0 : i32
    %c0_i32_0 = arith.constant 0 : i32
    return %arg0, %c0_i32 : i32, i32
  }
  func.func @transform_1(%arg0: i32) -> (i32, i32) {
    %c0_i32 = arith.constant 0 : i32
    %c0_i32_0 = arith.constant 0 : i32
    %c0_i32_1 = arith.constant 0 : i32
    return %c0_i32, %c0_i32_0 : i32, i32
  }
  func.func @transform_2(%arg0: i32) -> (i32, i32) {
    %c0_i32 = arith.constant 0 : i32
    %c0_i32_0 = arith.constant 0 : i32
    %c0_i32_1 = arith.constant 0 : i32
    return %c0_i32, %c0_i32_0 : i32, i32
  }
  func.func @transform_3(%arg0: i32) -> (i32, i32) {
    %c0_i32 = arith.constant 0 : i32
    %c0_i32_0 = arith.constant 0 : i32
    %c0_i32_1 = arith.constant 0 : i32
    return %c0_i32, %c0_i32_0 : i32, i32
  }
  func.func @transform_4(%arg0: i32) -> (i32, i32) {
    %c0_i32 = arith.constant 0 : i32
    %c0_i32_0 = arith.constant 0 : i32
    return %arg0, %c0_i32 : i32, i32
  }
}

</mosaic_0001>

<llo_original>
// kernel: tile.8
$region0: #{tile.8}
  #allocation0 [shape = 's32[1]{0}', space=sflag, size = 0x4, scoped, tag = 'scoped memory for tile.8']
  %s0 = inlined_call_operand.vmem [shape: f32[32], index: 0, kind: input, shape index: {}]
  %s1 = inlined_call_operand.vmem [shape: f32[8,32], index: 1, kind: output, shape index: {}]
  // Predicated region
  $region2: #{tile.8} parent=0 // pred_check
    _
  $region3: #{tile.8} parent=0 // pred_check_branch
    %3 = sbr.rel (0) target = $region5
  $region4: #{tile.8} parent=0 // pred_region
    _
  $region5: #{tile.8} parent=0 // pred_fallthru
    _
  %v4 = vld [vmem:[%s0] ss:$0 sm:$0xff]
  %5 = vst [vmem:[%s1] sm:$0xff] %v4

// kernel: tile.9
$region0: #{tile.9}
  %s0 = inlined_call_operand.vmem [shape: f32[8,32], index: 0, kind: input, shape index: {}]
  %s1 = inlined_call_operand.vmem [shape: f32[1,256], index: 1, kind: output, shape index: {}]
  $region1: #{tile.9} parent=0
    #allocation0 [shape = 'u8[8192]{0}', space=vmem, size = 0x2000, scoped, tag = 'scoped mem for output reshape']
    %s2 = smov 3
    %v3 = vld [vmem:[%s0] ss:$4 sm:%s2]
    %vm4 = vcmask 261120
    %5 = vst.msk [vmem:[#allocation0] ss:$8 sm:$0x3] %vm4, %v3
    %s6 = scalar_lea.vmem %s0, 3
    %s7 = smov 3
    %v8 = vld [vmem:[%s6] ss:$4 sm:%s7]
    %9 = vrot.lane.b32.xlu0 %v8, 96
    %v10 = vpop.permute.xlu0 %9
    %vm11 = vcmask 1048320
    %12 = vst.msk [vmem:[#allocation0] ss:$8 sm:$0x3] %vm11, %v10
    %s13 = scalar_lea.vmem %s0, 2
    %s14 = smov 3
    %v15 = vld [vmem:[%s13] ss:$4 sm:%s14]
    %16 = vrot.lane.b32.xlu0 %v15, 64
    %v17 = vpop.permute.xlu0 %16
    %vm18 = vcmask 785920
    %19 = vst.msk [vmem:[#allocation0] ss:$8 sm:$0x3] %vm18, %v17
    %s20 = scalar_lea.vmem %s0, 1
    %s21 = smov 3
    %v22 = vld [vmem:[%s20] ss:$4 sm:%s21]
    %23 = vrot.lane.b32.xlu0 %v22, 32
    %v24 = vpop.permute.xlu0 %23
    %vm25 = vcmask 523520
    %26 = vst.msk [vmem:[#allocation0] ss:$8 sm:$0x3] %vm25, %v24
    %s28 = sshllo.u32 0, 1
    %v30 = vld [vmem:[#allocation0] sm:%s28]
    %s31 = sshllo.u32 0, 1
    %32 = vst [vmem:[%s1] sm:%s31] %v30
    %s33 = scalar_lea.vmem [#allocation0], 8
    %v34 = vld [vmem:[%s33] sm:%s28]
    %s35 = sshllo.u32 0, 1
    %s36 = scalar_lea.vmem %s1, 1
    %37 = vst [vmem:[%s36] sm:%s35] %v34

// kernel: wheels_joints_in.1
$region0: #{wheels_joints_in.1}
  #allocation0 [shape = 'u32[]', space=smem, size = 0x4, offset = 0x4, fixed_abs, tag = 'smem constant byte address 0x4 - core index']
  #allocation1 [shape = 'u32[144,128]{1,0:T(1,128)}', space=vmem, size = 0x12000, scoped, tag = 'internal scratch']
  #allocation2 [shape = 'f32[1,1]{1,0:T(1,128)S(6)}', space=smem, size = 0x200, scoped, tag = 'scoped memory for wheels_joints_in.1']
  %s0 = inlined_call_operand.vmem [shape: f32[8,128], index: 0, kind: input, shape index: {}]
  %s1 = inlined_call_operand.vmem [shape: f32[128,256], index: 1, kind: input, shape index: {}]
  %s2 = inlined_call_operand.vmem [shape: f32[1,256], index: 2, kind: input, shape index: {}]
  %s3 = inlined_call_operand.<no memory space> [shape: f32[1,1], index: 3, kind: input, shape index: {}]
  %s4 = inlined_call_operand.vmem [shape: f32[8,256], index: 4, kind: output, shape index: {}]
  %s5 = sld [smem:[#allocation0]]
  $region26: #{wheels_joints_in.1} parent=0
    _
  %s7 = ssub.s32 1, %s5
  %s8 = scalar_select 0, %s7, %s5
  %9 = sst [smem:[#allocation2]] %s3
  // Predicated region
  $region2: #{wheels_joints_in.1} parent=0 // pred_check
    _
  $region3: #{wheels_joints_in.1} parent=0 // pred_check_branch
    %11 = sbr.rel (0) target = $region5
  $region4: #{wheels_joints_in.1} parent=0 // pred_region
    _
  $region5: #{wheels_joints_in.1} parent=0 // pred_fallthru
    _
  // Predicated region
  $region6: #{wheels_joints_in.1} parent=0 // pred_check
    _
  $region7: #{wheels_joints_in.1} parent=0 // pred_check_branch
    %13 = sbr.rel (0) target = $region9
  $region8: #{wheels_joints_in.1} parent=0 // pred_region
    _
  $region9: #{wheels_joints_in.1} parent=0 // pred_fallthru
    _
  // Predicated region
  $region10: #{wheels_joints_in.1} parent=0 // pred_check
    _
  $region11: #{wheels_joints_in.1} parent=0 // pred_check_branch
    %15 = sbr.rel (0) target = $region13
  $region12: #{wheels_joints_in.1} parent=0 // pred_region
    _
  $region13: #{wheels_joints_in.1} parent=0 // pred_fallthru
    _
  // Predicated region
  $region14: #{wheels_joints_in.1} parent=0 // pred_check
    _
  $region15: #{wheels_joints_in.1} parent=0 // pred_check_branch
    %17 = sbr.rel (0) target = $region17
  $region16: #{wheels_joints_in.1} parent=0 // pred_region
    _
  $region17: #{wheels_joints_in.1} parent=0 // pred_fallthru
    _
  %v18 = vld [vmem:[%s0] sm:$0xff]
  %v19 = vld [vmem:[%s1] sm:$0xff]
  %v20 = vld [vmem:[%s1 + $0x8] sm:$0xff]
  %v21 = vld [vmem:[%s1 + $0x10] sm:$0xff]
  %v22 = vld [vmem:[%s1 + $0x18] sm:$0xff]
  %v23 = vld [vmem:[%s1 + $0x20] sm:$0xff]
  %v24 = vld [vmem:[%s1 + $0x28] sm:$0xff]
  %v25 = vld [vmem:[%s1 + $0x30] sm:$0xff]
  %v26 = vld [vmem:[%s1 + $0x38] sm:$0xff]
  %v27 = vld [vmem:[%s1 + $0x40] sm:$0xff]
  %v28 = vld [vmem:[%s1 + $0x48] sm:$0xff]
  %v29 = vld [vmem:[%s1 + $0x50] sm:$0xff]
  %v30 = vld [vmem:[%s1 + $0x58] sm:$0xff]
  %v31 = vld [vmem:[%s1 + $0x60] sm:$0xff]
  %v32 = vld [vmem:[%s1 + $0x68] sm:$0xff]
  %v33 = vld [vmem:[%s1 + $0x70] sm:$0xff]
  %v34 = vld [vmem:[%s1 + $0x78] sm:$0xff]
  %v35 = vld [vmem:[%s1 + $0x80] sm:$0xff]
  %v36 = vld [vmem:[%s1 + $0x88] sm:$0xff]
  %v37 = vld [vmem:[%s1 + $0x90] sm:$0xff]
  %v38 = vld [vmem:[%s1 + $0x98] sm:$0xff]
  %v39 = vld [vmem:[%s1 + $0xa0] sm:$0xff]
  %v40 = vld [vmem:[%s1 + $0xa8] sm:$0xff]
  %v41 = vld [vmem:[%s1 + $0xb0] sm:$0xff]
  %v42 = vld [vmem:[%s1 + $0xb8] sm:$0xff]
  %v43 = vld [vmem:[%s1 + $0xc0] sm:$0xff]
  %v44 = vld [vmem:[%s1 + $0xc8] sm:$0xff]
  %v45 = vld [vmem:[%s1 + $0xd0] sm:$0xff]
  %v46 = vld [vmem:[%s1 + $0xd8] sm:$0xff]
  %v47 = vld [vmem:[%s1 + $0xe0] sm:$0xff]
  %v48 = vld [vmem:[%s1 + $0xe8] sm:$0xff]
  %v49 = vld [vmem:[%s1 + $0xf0] sm:$0xff]
  %v50 = vld [vmem:[%s1 + $0xf8] sm:$0xff]
  %v51 = vld [vmem:[%s2] sm:$0x3]
  %v53 = vlaneseq
  %v54 = vshrl.u32 %v53, 7
  %v55 = vsub.s32 0, %v54
  %v56 = vrot.slane %v51, %v55
  %v57 = vlaneseq
  %v58 = vshrl.u32 %v57, 7
  %v59 = vsub.s32 1, %v58
  %v60 = vrot.slane %v51, %v59
  %63 = vmatprep.subr.mxu0 %v20
  %64 = vmatpush1.msra.mxu0 %v19
  %65 = vmatprep.subr.mxu0 %v22
  %66 = vmatpush1.msra.mxu0 %v21
  %67 = vmatprep.subr.mxu0 %v24
  %68 = vmatpush1.msra.mxu0 %v23
  %69 = vmatprep.subr.mxu0 %v26
  %70 = vmatpush1.msra.mxu0 %v25
  %71 = vmatprep.subr.mxu0 %v28
  %72 = vmatpush1.msra.mxu0 %v27
  %73 = vmatprep.subr.mxu0 %v30
  %74 = vmatpush1.msra.mxu0 %v29
  %75 = vmatprep.subr.mxu0 %v32
  %76 = vmatpush1.msra.mxu0 %v31
  %77 = vmatprep.subr.mxu0 %v34
  %78 = vmatpush1.msra.mxu0 %v33
  %79 = vmatprep.subr.mxu0 %v36
  %80 = vmatpush1.msra.mxu0 %v35
  %81 = vmatprep.subr.mxu0 %v38
  %82 = vmatpush1.msra.mxu0 %v37
  %83 = vmatprep.subr.mxu0 %v40
  %84 = vmatpush1.msra.mxu0 %v39
  %85 = vmatprep.subr.mxu0 %v42
  %86 = vmatpush1.msra.mxu0 %v41
  %87 = vmatprep.subr.mxu0 %v44
  %88 = vmatpush1.msra.mxu0 %v43
  %89 = vmatprep.subr.mxu0 %v46
  %90 = vmatpush1.msra.mxu0 %v45
  %91 = vmatprep.subr.mxu0 %v48
  %92 = vmatpush1.msra.mxu0 %v47
  %93 = vmatprep.subr.mxu0 %v50
  %94 = vmatpush1.msra.mxu0 %v49
  %95 = vmatprep.subr.mxu0 0.0
  %96 = vmatpush1.msra.mxu0 0.0
  %97 = vmatprep.subr.mxu0 0.0
  %98 = vmatpush1.msra.mxu0 0.0
  %99 = vmatprep.subr.mxu0 0.0
  %100 = vmatpush1.msra.mxu0 0.0
  %101 = vmatprep.subr.mxu0 0.0
  %102 = vmatpush1.msra.mxu0 0.0
  %103 = vmatprep.subr.mxu0 0.0
  %104 = vmatpush1.msra.mxu0 0.0
  %105 = vmatprep.subr.mxu0 0.0
  %106 = vmatpush1.msra.mxu0 0.0
  %107 = vmatprep.subr.mxu0 0.0
  %108 = vmatpush1.msra.mxu0 0.0
  %109 = vmatprep.subr.mxu0 0.0
  %110 = vmatpush1.msra.mxu0 0.0
  %111 = vmatprep.subr.mxu0 0.0
  %112 = vmatpush1.msra.mxu0 0.0
  %113 = vmatprep.subr.mxu0 0.0
  %114 = vmatpush1.msra.mxu0 0.0
  %115 = vmatprep.subr.mxu0 0.0
  %116 = vmatpush1.msra.mxu0 0.0
  %117 = vmatprep.subr.mxu0 0.0
  %118 = vmatpush1.msra.mxu0 0.0
  %119 = vmatprep.subr.mxu0 0.0
  %120 = vmatpush1.msra.mxu0 0.0
  %121 = vmatprep.subr.mxu0 0.0
  %122 = vmatpush1.msra.mxu0 0.0
  %123 = vmatprep.subr.mxu0 0.0
  %124 = vmatpush1.msra.mxu0 0.0
  %125 = vmatprep.subr.mxu0 0.0
  %126 = vmatpush1.msra.mxu0 0.0
  %127 = vmatprep.mubr.f32.mxu0 0.0
  %128 = vmatmul.mubr.f32.gmra.mrb[0].mxu0 %v18
  %v129 = vpop.f32.mrb[0].mxu0
  %v130 = vadd.f32 %v56, %v129
  %v131 = vpop.f32.mrb[0].mxu0
  %v132 = vadd.f32 %v60, %v131
  %133 = vdwg.mxu0
  %s134 = sld [smem:[#allocation2]]
  %vm135 = vcmp.gt.f32.partialorder %v130, 0.0
  %vm136 = vcmp.gt.f32.partialorder %v132, 0.0
  %v137 = vstv %s134
  %v138 = vmul.f32 %v137, %v130
  %v139 = vmul.f32 %v137, %v132
  %v140 = vsel %vm135, %v130, %v138
  %v141 = vsel %vm136, %v132, %v139
  %142 = vst [vmem:[%s4] sm:$0xff] %v140
  %143 = vst [vmem:[%s4 + $0x8] sm:$0xff] %v141
  // Predicated region
  $region18: #{wheels_joints_in.1} parent=0 // pred_check
    _
  $region19: #{wheels_joints_in.1} parent=0 // pred_check_branch
    %145 = sbr.rel (0) target = $region21
  $region20: #{wheels_joints_in.1} parent=0 // pred_region
    _
  $region21: #{wheels_joints_in.1} parent=0 // pred_fallthru
    _
  // Predicated region
  $region22: #{wheels_joints_in.1} parent=0 // pred_check
    _
  $region23: #{wheels_joints_in.1} parent=0 // pred_check_branch
    %147 = sbr.rel (0) target = $region25
  $region24: #{wheels_joints_in.1} parent=0 // pred_region
    _
  $region25: #{wheels_joints_in.1} parent=0 // pred_fallthru
    _

</llo_original>
